<compile_context>
chip_gen: v6e
topology: v6e:2x2x1
jax: 0.10.0
libtpu: 0.0.40
codegen_flags: <defaults>
</compile_context>

<pallas_src>
import functools

import jax
import jax.numpy as jnp
from jax.experimental import pallas as pl
from jax.experimental.pallas import tpu as pltpu


def _head(probe_f32, gallery_f32, w_ref, b_ref, out_ref):
    diff = probe_f32 - gallery_f32                      # VPU, f32
    sq = diff * diff                                    # VPU, f32
    acc = jnp.dot(sq.astype(w_ref.dtype), w_ref[...],   # MXU, f32 accumulate
                  preferred_element_type=jnp.float32)
    out_ref[...] = (acc + b_ref[...]).astype(out_ref.dtype)


def _simscore_fused_kernel(x_ref, w_ref, b_ref, out_ref, *, d):
    # x_ref: (p_tile, 2*D); probe in lanes [:D], gallery in lanes [D:].
    # D is a multiple of 128 on this path, so the lane slice is aligned (free).
    probe = x_ref[:, :d].astype(jnp.float32)
    gallery = x_ref[:, d:].astype(jnp.float32)
    _head(probe, gallery, w_ref, b_ref, out_ref)


def _simscore_split_kernel(p_ref, g_ref, w_ref, b_ref, out_ref):
    _head(p_ref[...].astype(jnp.float32), g_ref[...].astype(jnp.float32),
          w_ref, b_ref, out_ref)


def _pick_p_tile(p, d, c, in_bpe, out_bpe, w_bpe):
    """Largest row tile whose full VMEM working set fits the budget, preferring
    >=4 grid steps (pipelining + dual-TC sharding) for big problems."""
    vmem_budget = 40 * 1024 * 1024          # headroom under the 48 MiB limit / v7x 64 MiB
    fixed = 2 * (d * c * w_bpe + c * 4)     # resident weight + f32 bias (2 bufs each)
    per_row = 2 * (2 * d * in_bpe + c * out_bpe)   # input + output tiles, 2 bufs each
    cap = max(8, ((vmem_budget - fixed) // per_row) // 8 * 8)
    if p >= 4 * 512:
        # big problem: >=4 steps, tile in [512, 4096] rows, multiple of 8
        target = max(512, min(4096, (-(-p // 4) + 7) // 8 * 8))
    else:
        target = p
    return min(p, max(8, min(cap, target)))


def similarity_score(x, weight, bias, *, p_tile=None,
                     mxu_dtype=jnp.bfloat16, out_dtype=None):
    """Pallas-TPU SIMILARITY_SCORE forward.

    x:      (N, ...) activations, N even; prod(x.shape[1:]) == input_num.
            Streamed in its native dtype (bf16 recommended).
    weight: (input_num, class_num)  -- transposed w.r.t. torch nn.Linear.weight.
    bias:   (class_num,) or (1, class_num).
    returns (N // 2, class_num) logits in `out_dtype` (default: x.dtype).
    """
    n = x.shape[0]
    if n % 2 != 0:
        raise RuntimeError('the batch size should be even number!')
    p = n // 2
    d = 1
    for s in x.shape[1:]:
        d *= s

    if weight.ndim != 2 or weight.shape[0] != d:
        raise ValueError(
            f'weight must be (input_num={d}, class_num); got {weight.shape}. '
            'If coming from torch nn.Linear.weight, pass weight.T.')
    c = weight.shape[1]
    if bias.size != c:
        raise ValueError(f'bias must have {c} elements; got shape {bias.shape}')

    if out_dtype is None:
        out_dtype = x.dtype

    # MXU operands in mxu_dtype (bf16 by default); accumulation stays f32.
    w = weight.astype(mxu_dtype)
    b = bias.reshape(1, c).astype(jnp.float32)

    in_bpe = jnp.dtype(x.dtype).itemsize
    out_bpe = jnp.dtype(out_dtype).itemsize
    w_bpe = jnp.dtype(mxu_dtype).itemsize
    if p_tile is None:
        p_tile = _pick_p_tile(p, d, c, in_bpe, out_bpe, w_bpe)
    grid = (pl.cdiv(p, p_tile),)

    cost = pl.CostEstimate(
        flops=2 * p * d * c + 3 * p * d,
        transcendentals=0,
        bytes_accessed=(p * 2 * d * in_bpe + d * c * w_bpe + c * 4
                        + p * c * out_bpe))

    w_spec = pl.BlockSpec((d, c), lambda i: (0, 0))      # resident weight
    b_spec = pl.BlockSpec((1, c), lambda i: (0, 0))      # resident bias
    out_spec = pl.BlockSpec((p_tile, c), lambda i: (i, 0))
    params = pltpu.CompilerParams(
        dimension_semantics=("parallel",),
        vmem_limit_bytes=48 * 1024 * 1024,
    )
    out_shape = jax.ShapeDtypeStruct((p, c), out_dtype)

    if d % 128 == 0:
        # Fused path: one HBM stream, row i = [probe_i | gallery_i]; the lane
        # split at D is 128-aligned so the in-kernel slice costs nothing.
        x2 = x.reshape(p, 2 * d)
        return pl.pallas_call(
            functools.partial(_simscore_fused_kernel, d=d),
            out_shape=out_shape,
            grid_spec=pltpu.PrefetchScalarGridSpec(
                num_scalar_prefetch=0,
                grid=grid,
                in_specs=[pl.BlockSpec((p_tile, 2 * d), lambda i: (i, 0)),
                          w_spec, b_spec],
                out_specs=out_spec),
            compiler_params=params,
            cost_estimate=cost,
        )(x2, w, b)

    # Fallback (D not a multiple of 128): split probe/gallery in the wrapper so
    # the kernel never does an unaligned lane slice (per-tile Mosaic relayout).
    x3 = x.reshape(p, 2, d)
    probe = x3[:, 0, :]
    gallery = x3[:, 1, :]
    return pl.pallas_call(
        _simscore_split_kernel,
        out_shape=out_shape,
        grid_spec=pltpu.PrefetchScalarGridSpec(
            num_scalar_prefetch=0,
            grid=grid,
            in_specs=[pl.BlockSpec((p_tile, d), lambda i: (i, 0)),
                      pl.BlockSpec((p_tile, d), lambda i: (i, 0)),
                      w_spec, b_spec],
            out_specs=out_spec),
        compiler_params=params,
        cost_estimate=cost,
    )(probe, gallery, w, b)


if __name__ == "__main__":
    key = jax.random.PRNGKey(0)
    k1, k2, k3, k4 = jax.random.split(key, 4)

    # --- Test A: module defaults (input_num=128, class_num=16), f32 inputs
    # with exact-f32 MXU operands; exercises the fused lane-aligned path. ---
    batch, input_num, class_num = 8, 128, 16
    x = jax.random.normal(k1, (batch, input_num), dtype=jnp.float32)
    weight = 0.001 * jax.random.normal(k2, (input_num, class_num), dtype=jnp.float32)
    bias = jnp.zeros((class_num,), dtype=jnp.float32)

    out = similarity_score(x, weight, bias, mxu_dtype=jnp.float32)
    out = jax.block_until_ready(out)

    xr = x.reshape(batch // 2, 2, -1)
    sq = (xr[:, 0, :] - xr[:, 1, :]) ** 2
    ref = jnp.dot(sq, weight, precision=jax.lax.Precision.HIGHEST) + bias
    assert out.shape == (batch // 2, class_num) and out.dtype == jnp.float32
    assert jnp.allclose(out, ref, atol=1e-4, rtol=1e-4)

    # --- Test B: bf16 activations, default bf16 MXU operands / bf16 output,
    # input_num not a multiple of 128 -> exercises the split fallback path. ---
    batch_b, input_b, class_b = 16, 96, 20
    xb = jax.random.normal(k3, (batch_b, input_b), dtype=jnp.float32).astype(jnp.bfloat16)
    wb = 0.001 * jax.random.normal(k4, (input_b, class_b), dtype=jnp.float32)
    bb = 0.01 * jnp.arange(class_b, dtype=jnp.float32)

    outb = similarity_score(xb, wb, bb)
    outb = jax.block_until_ready(outb)

    xbr = xb.astype(jnp.float32).reshape(batch_b // 2, 2, -1)
    sqb = (xbr[:, 0, :] - xbr[:, 1, :]) ** 2
    refb = jnp.dot(sqb, wb, precision=jax.lax.Precision.HIGHEST) + bb
    assert outb.shape == (batch_b // 2, class_b) and outb.dtype == jnp.bfloat16
    assert jnp.allclose(outb.astype(jnp.float32), refb, atol=3e-3, rtol=3e-2)

    print("KERNEL_OK")
</pallas_src>

<mosaic_0001>
module attributes {stable_mosaic.version = 11 : i64} {
  func.func @_simscore_fused_kernel(%arg0: i32, %arg1: memref<4x256xf32, #tpu.memory_space<vmem>>, %arg2: memref<128x16xf32, #tpu.memory_space<vmem>>, %arg3: memref<1x16xf32, #tpu.memory_space<vmem>>, %arg4: memref<4x16xf32, #tpu.memory_space<vmem>>) attributes {dimension_semantics = [#tpu.dimension_semantics<parallel>], iteration_bounds = array<i64: 1>, scalar_prefetch = 0 : i64, scratch_operands = 0 : i64, tpu.core_type = #tpu.core_type<tc>, window_params = [{transform_indices = @transform_0, window_bounds = array<i64: 4, 256>}, {pipeline_mode = #tpu.pipeline_mode<synchronous>, transform_indices = @transform_1, window_bounds = array<i64: 128, 16>}, {pipeline_mode = #tpu.pipeline_mode<synchronous>, transform_indices = @transform_2, window_bounds = array<i64: 1, 16>}, {transform_indices = @transform_3, window_bounds = array<i64: 4, 16>}]} {
    %c0 = arith.constant 0 : index
    %c0_0 = arith.constant 0 : index
    %0 = vector.load %arg1[%c0, %c0_0] : memref<4x256xf32, #tpu.memory_space<vmem>>, vector<4x128xf32>
    %c0_1 = arith.constant 0 : index
    %c128 = arith.constant 128 : index
    %1 = vector.load %arg1[%c0_1, %c128] : memref<4x256xf32, #tpu.memory_space<vmem>>, vector<4x128xf32>
    %2 = arith.subf %0, %1 : vector<4x128xf32>
    %3 = arith.mulf %2, %2 : vector<4x128xf32>
    %c0_2 = arith.constant 0 : index
    %c0_3 = arith.constant 0 : index
    %4 = vector.load %arg2[%c0_2, %c0_3] : memref<128x16xf32, #tpu.memory_space<vmem>>, vector<128x16xf32>
    %cst = arith.constant dense<0.000000e+00> : vector<4x16xf32>
    %5 = tpu.matmul %3, %4, %cst {dimension_numbers = #tpu.dot_dimension_numbers<[1], [0], [0], [1], [0, 0, 1, 1], [], []>} : vector<4x128xf32>, vector<128x16xf32>, vector<4x16xf32> -> vector<4x16xf32>
    %c0_4 = arith.constant 0 : index
    %c0_5 = arith.constant 0 : index
    %6 = vector.load %arg3[%c0_4, %c0_5] : memref<1x16xf32, #tpu.memory_space<vmem>>, vector<1x16xf32>
    %7 = vector.broadcast %6 : vector<1x16xf32> to vector<4x16xf32>
    %8 = arith.addf %5, %7 : vector<4x16xf32>
    %c0_6 = arith.constant 0 : index
    %c0_7 = arith.constant 0 : index
    %9 = vector.load %arg4[%c0_6, %c0_7] : memref<4x16xf32, #tpu.memory_space<vmem>>, vector<4x16xf32>
    tpu.vector_store %arg4[%c0_6, %c0_7], %8 {strides = array<i32>} : memref<4x16xf32, #tpu.memory_space<vmem>>, vector<4x16xf32>,
    return
  }
  func.func @transform_0(%arg0: i32) -> (i32, i32) {
    %c0_i32 = arith.constant 0 : i32
    %c0_i32_0 = arith.constant 0 : i32
    return %arg0, %c0_i32 : i32, i32
  }
  func.func @transform_1(%arg0: i32) -> (i32, i32) {
    %c0_i32 = arith.constant 0 : i32
    %c0_i32_0 = arith.constant 0 : i32
    %c0_i32_1 = arith.constant 0 : i32
    return %c0_i32, %c0_i32_0 : i32, i32
  }
  func.func @transform_2(%arg0: i32) -> (i32, i32) {
    %c0_i32 = arith.constant 0 : i32
    %c0_i32_0 = arith.constant 0 : i32
    %c0_i32_1 = arith.constant 0 : i32
    return %c0_i32, %c0_i32_0 : i32, i32
  }
  func.func @transform_3(%arg0: i32) -> (i32, i32) {
    %c0_i32 = arith.constant 0 : i32
    %c0_i32_0 = arith.constant 0 : i32
    return %arg0, %c0_i32 : i32, i32
  }
}

</mosaic_0001>

<llo_original>
// kernel: tpu_custom_call.1
$region0: #{tpu_custom_call.1}
  #allocation0 [shape = 'u32[]', space=smem, size = 0x4, offset = 0x4, fixed_abs, tag = 'smem constant byte address 0x4 - core index']
  #allocation1 [shape = 'u32[144,128]{1,0:T(1,128)}', space=vmem, size = 0x12000, scoped, tag = 'internal scratch']
  %s0 = inlined_call_operand.vmem [shape: f32[4,256], index: 0, kind: input, shape index: {}]
  %s1 = inlined_call_operand.vmem [shape: f32[128,16], index: 1, kind: input, shape index: {}]
  %s2 = inlined_call_operand.vmem [shape: f32[1,16], index: 2, kind: input, shape index: {}]
  %s3 = inlined_call_operand.hbm [shape: f32[4,16], index: 3, kind: output, shape index: {}]
  %s4 = sld [smem:[#allocation0]]
  $region22: #{tpu_custom_call.1} parent=0
    _
  %s6 = ssub.s32 1, %s4
  %s7 = scalar_select 0, %s6, %s4
  $region1: #{tpu_custom_call.1} parent=0
    #allocation2 [shape = 'u8[2048]{0}', space=vmem, size = 0x800, scoped, tag = 'output window, operand 0, single buffered']
    #allocation3 [shape = 's32[1]{0}', space=sflag, size = 0x4, scoped, tag = 'scoped memory for tpu_custom_call.1']
    %8 = vsyncpa [#allocation3], 0
    // Predicated region
    $region2: #{tpu_custom_call.1} parent=1 // pred_check
      _
    $region3: #{tpu_custom_call.1} parent=1 // pred_check_branch
      %10 = sbr.rel (0) target = $region5
    $region4: #{tpu_custom_call.1} parent=1 // pred_region
      _
    $region5: #{tpu_custom_call.1} parent=1 // pred_fallthru
      _
    // Predicated region
    $region6: #{tpu_custom_call.1} parent=1 // pred_check
      _
    $region7: #{tpu_custom_call.1} parent=1 // pred_check_branch
      %12 = sbr.rel (0) target = $region9
    $region8: #{tpu_custom_call.1} parent=1 // pred_region
      _
    $region9: #{tpu_custom_call.1} parent=1 // pred_fallthru
      _
    // Predicated region
    $region10: #{tpu_custom_call.1} parent=1 // pred_check
      _
    $region11: #{tpu_custom_call.1} parent=1 // pred_check_branch
      %14 = sbr.rel (0) target = $region13
    $region12: #{tpu_custom_call.1} parent=1 // pred_region
      _
    $region13: #{tpu_custom_call.1} parent=1 // pred_fallthru
      _
    %v15 = vld [vmem:[%s0] sm:$0xf]
    %v16 = vld [vmem:[%s0 + $0x4] sm:$0xf]
    %v17 = vsub.f32 %v15, %v16
    %v18 = vmul.f32 %v17, %v17
    %v19 = vld [vmem:[%s1] sm:$0xff]
    %v20 = vld [vmem:[%s1 + $0x8] sm:$0xff]
    %v21 = vld [vmem:[%s1 + $0x10] sm:$0xff]
    %v22 = vld [vmem:[%s1 + $0x18] sm:$0xff]
    %v23 = vld [vmem:[%s1 + $0x20] sm:$0xff]
    %v24 = vld [vmem:[%s1 + $0x28] sm:$0xff]
    %v25 = vld [vmem:[%s1 + $0x30] sm:$0xff]
    %v26 = vld [vmem:[%s1 + $0x38] sm:$0xff]
    %v27 = vld [vmem:[%s1 + $0x40] sm:$0xff]
    %v28 = vld [vmem:[%s1 + $0x48] sm:$0xff]
    %v29 = vld [vmem:[%s1 + $0x50] sm:$0xff]
    %v30 = vld [vmem:[%s1 + $0x58] sm:$0xff]
    %v31 = vld [vmem:[%s1 + $0x60] sm:$0xff]
    %v32 = vld [vmem:[%s1 + $0x68] sm:$0xff]
    %v33 = vld [vmem:[%s1 + $0x70] sm:$0xff]
    %v34 = vld [vmem:[%s1 + $0x78] sm:$0xff]
    %v35 = vld [vmem:[%s2] sm:$0x1]
    %v37 = vlaneseq
    %v38 = vshrl.u32 %v37, 7
    %v39 = vsub.s32 0, %v38
    %v40 = vrot.slane %v35, %v39
    %42 = vmatprep.subr.mxu0 0.0
    %43 = vmatpush1.msra.mxu0 %v34
    %44 = vmatprep.subr.mxu0 0.0
    %45 = vmatpush1.msra.mxu0 %v33
    %46 = vmatprep.subr.mxu0 0.0
    %47 = vmatpush1.msra.mxu0 %v32
    %48 = vmatprep.subr.mxu0 0.0
    %49 = vmatpush1.msra.mxu0 %v31
    %50 = vmatprep.subr.mxu0 0.0
    %51 = vmatpush1.msra.mxu0 %v30
    %52 = vmatprep.subr.mxu0 0.0
    %53 = vmatpush1.msra.mxu0 %v29
    %54 = vmatprep.subr.mxu0 0.0
    %55 = vmatpush1.msra.mxu0 %v28
    %56 = vmatprep.subr.mxu0 0.0
    %57 = vmatpush1.msra.mxu0 %v27
    %58 = vmatprep.subr.mxu0 0.0
    %59 = vmatpush1.msra.mxu0 %v26
    %60 = vmatprep.subr.mxu0 0.0
    %61 = vmatpush1.msra.mxu0 %v25
    %62 = vmatprep.subr.mxu0 0.0
    %63 = vmatpush1.msra.mxu0 %v24
    %64 = vmatprep.subr.mxu0 0.0
    %65 = vmatpush1.msra.mxu0 %v23
    %66 = vmatprep.subr.mxu0 0.0
    %67 = vmatpush1.msra.mxu0 %v22
    %68 = vmatprep.subr.mxu0 0.0
    %69 = vmatpush1.msra.mxu0 %v21
    %70 = vmatprep.subr.mxu0 0.0
    %71 = vmatpush1.msra.mxu0 %v20
    %72 = vmatprep.subr.mxu0 0.0
    %73 = vmatpush1.msra.mxu0 %v19
    %74 = vmatprep.subr.mxu0 0.0
    %75 = vmatpush2.msra.mxu0 0.0
    %76 = vmatprep.subr.mxu0 0.0
    %77 = vmatpush2.msra.mxu0 0.0
    %78 = vmatprep.subr.mxu0 0.0
    %79 = vmatpush2.msra.mxu0 0.0
    %80 = vmatprep.subr.mxu0 0.0
    %81 = vmatpush2.msra.mxu0 0.0
    %82 = vmatprep.subr.mxu0 0.0
    %83 = vmatpush2.msra.mxu0 0.0
    %84 = vmatprep.subr.mxu0 0.0
    %85 = vmatpush2.msra.mxu0 0.0
    %86 = vmatprep.subr.mxu0 0.0
    %87 = vmatpush2.msra.mxu0 0.0
    %88 = vmatprep.subr.mxu0 0.0
    %89 = vmatpush2.msra.mxu0 0.0
    %90 = vmatprep.subr.mxu0 0.0
    %91 = vmatpush2.msra.mxu0 0.0
    %92 = vmatprep.subr.mxu0 0.0
    %93 = vmatpush2.msra.mxu0 0.0
    %94 = vmatprep.subr.mxu0 0.0
    %95 = vmatpush2.msra.mxu0 0.0
    %96 = vmatprep.subr.mxu0 0.0
    %97 = vmatpush2.msra.mxu0 0.0
    %98 = vmatprep.subr.mxu0 0.0
    %99 = vmatpush2.msra.mxu0 0.0
    %100 = vmatprep.subr.mxu0 0.0
    %101 = vmatpush2.msra.mxu0 0.0
    %102 = vmatprep.subr.mxu0 0.0
    %103 = vmatpush2.msra.mxu0 0.0
    %104 = vmatprep.subr.mxu0 0.0
    %105 = vmatpush2.msra.mxu0 0.0
    %106 = vmatprep.mubr.f32.mxu0 0.0
    %107 = vmatmul.mubr.f32.gmra.mxu0 %v18
    %v108 = vpop.f32.mrf.mxu0
    %v109 = vadd.f32 %v40, %v108
    %v110 = vpop.f32.mrf.mxu0
    %111 = vdwg.mxu0
    %vm112 = vcmask 125952
    %113 = vst.msk [vmem:[#allocation2] sm:$0xf] %vm112, %v109
    // Predicated region
    $region14: #{tpu_custom_call.1} parent=1 // pred_check
      _
    $region15: #{tpu_custom_call.1} parent=1 // pred_check_branch
      %115 = sbr.rel (0) target = $region17
    $region16: #{tpu_custom_call.1} parent=1 // pred_region
      %s117 = ssub.s32 64, 64
      %118 = vsyncadd [#allocation3], %s117
      %s120 = sshll.u32 [#allocation2], 4
      %s121 = int_to_ptr.vmem [resolvable:$true] %s120
      %123 = dma.vmem_to_hbm [thread:$0]  %s121, 64, %s3, [#allocation3]
    $region17: #{tpu_custom_call.1} parent=1 // pred_fallthru
      _
    // Predicated region
    $region18: #{tpu_custom_call.1} parent=1 // pred_check
      _
    $region19: #{tpu_custom_call.1} parent=1 // pred_check_branch
      %125 = sbr.rel (0) target = $region21
    $region20: #{tpu_custom_call.1} parent=1 // pred_region
      %126 = dma.done [#allocation3], 64
    $region21: #{tpu_custom_call.1} parent=1 // pred_fallthru
      _
    %127 = vsyncpa [#allocation3], 1

</llo_original>
